<compile_context>
chip_gen: v7x
topology: tpu7x:2x2x1
jax: 0.10.0
libtpu: 0.0.40
codegen_flags: <defaults>
</compile_context>

<pallas_src>
import functools

import jax
import jax.numpy as jnp
from jax import lax
from jax.experimental import pallas as pl
from jax.experimental.pallas import tpu as pltpu


def _round_up(x, m):
    return (x + m - 1) // m * m


def _f1_loss_kernel(pred_ref, label_ref, tp_ref, ps_ref, tc_ref, *,
                    n_valid, block_n, chunk, steps_per_core):
    core = pl.program_id(0)
    step = pl.program_id(1)

    # Output blocks are per-core accumulators (their index_map ignores `step`,
    # so they stay VMEM-resident across the whole inner reduction axis).
    @pl.when(step == 0)
    def _():
        tp_ref[...] = jnp.zeros_like(tp_ref)
        ps_ref[...] = jnp.zeros_like(ps_ref)
        tc_ref[...] = jnp.zeros_like(tc_ref)

    c = pred_ref.shape[0]
    # Logical starting column of this block in the full (C, N) batch.  Masking
    # is done against this logical index, so clamped / garbage data in partial
    # or fully out-of-bounds blocks can never contribute.
    block_col0 = (core * steps_per_core + step) * block_n

    # Hoisted iotas (reused by every chunk).
    lane = lax.broadcasted_iota(jnp.int32, (1, chunk), 1)
    class_ids = lax.broadcasted_iota(jnp.int32, (c, chunk), 0)

    def chunk_body(k, carry):
        off = pl.multiple_of(k * chunk, chunk)
        logits = pred_ref[:, pl.ds(off, chunk)]          # (C, chunk) f32
        labels = label_ref[:, pl.ds(off, chunk)]         # (1, chunk) int32

        col = block_col0 + off + lane                    # (1, chunk) logical col
        valid = col < n_valid                            # (1, chunk) bool

        # Numerically stable softmax over the class (sublane) axis.
        m = jnp.max(logits, axis=0, keepdims=True)       # (1, chunk)
        e = jnp.exp(logits - m)                          # (C, chunk)
        denom = jnp.sum(e, axis=0, keepdims=True)        # (1, chunk)
        y_pred = e * pl.reciprocal(denom, approx=False)  # (C, chunk)
        # NaN-safe tail mask: garbage columns (Inf/NaN) are hard-selected to 0.
        y_pred = jnp.where(valid, y_pred, 0.0)

        # One-hot compare with the valid predicate folded in.
        eq = (class_ids == labels) & valid               # (C, chunk) bool

        # Lane-dense accumulation: pure VALU adds, no cross-lane reduce here.
        tp_ref[...] += jnp.where(eq, y_pred, 0.0)        # true positives
        ps_ref[...] += y_pred                            # sum of probabilities
        tc_ref[...] += eq.astype(jnp.float32)            # per-class counts
        return carry

    lax.fori_loop(0, block_n // chunk, chunk_body, 0)


@functools.partial(
    jax.jit,
    static_argnames=("epsilon", "num_classes", "block_n", "chunk", "num_cores"))
def f1_loss(y_pred, y_true, *, epsilon=1e-07, num_classes=9,
            block_n=65536, chunk=256, num_cores=2):
    """Pallas equivalent of F1_Loss.forward(y_pred, y_true)."""
    assert y_pred.ndim == 2
    assert y_true.ndim == 1
    n, c = y_pred.shape
    assert c == num_classes
    assert chunk % 128 == 0

    # Layout plumbing kept inside this jit: batch on lanes, classes on sublanes.
    # (Produce a (C, N) activation layout upstream to drop this extra pass.)
    logits_t = y_pred.astype(jnp.float32).T            # (C, N)
    labels = y_true.astype(jnp.int32).reshape(1, n)    # (1, N)

    # Batch tile: multiple of `chunk`, as large as the VMEM budget allows.
    # Double-buffered block cost ~ (64 + 32) * 2 * TN bytes (C pads 9->16
    # sublanes), so TN=65536 is ~12 MiB — under every generation's limit.
    tn = _round_up(min(block_n, _round_up(n, chunk)), chunk)
    num_blocks = pl.cdiv(n, tn)
    steps_per_core = pl.cdiv(num_blocks, num_cores)

    kernel = functools.partial(
        _f1_loss_kernel,
        n_valid=n, block_n=tn, chunk=chunk, steps_per_core=steps_per_core)

    acc_shape = jax.ShapeDtypeStruct((num_cores, c, chunk), jnp.float32)
    out_spec = pl.BlockSpec((None, c, chunk), lambda core, i: (core, 0, 0))

    tp_p, ps_p, tc_p = pl.pallas_call(
        kernel,
        out_shape=(acc_shape, acc_shape, acc_shape),
        grid_spec=pltpu.PrefetchScalarGridSpec(
            num_scalar_prefetch=0,
            grid=(num_cores, steps_per_core),
            in_specs=[
                pl.BlockSpec((c, tn), lambda core, i: (0, core * steps_per_core + i)),
                pl.BlockSpec((1, tn), lambda core, i: (0, core * steps_per_core + i)),
            ],
            out_specs=(out_spec, out_spec, out_spec),
        ),
        compiler_params=pltpu.CompilerParams(
            # Batch is split across TensorCores (v7x megacore), each core runs
            # its own "arbitrary" reduction over its share of the tiles.
            dimension_semantics=("parallel", "arbitrary"),
            vmem_limit_bytes=32 * 1024 * 1024),
    )(logits_t, labels)

    # Tiny per-class epilogue (9 elements) in plain JAX inside the same jit —
    # cheaper than a second micro pallas_call; exactly the reference math.
    tp = jnp.sum(tp_p, axis=(0, 2))
    ps = jnp.sum(ps_p, axis=(0, 2))
    tc = jnp.sum(tc_p, axis=(0, 2))
    fp = ps - tp            # == sum((1 - y_true) * y_pred)
    fn = tc - tp            # == sum(y_true * (1 - y_pred))
    precision = tp / (tp + fp + epsilon)
    recall = tp / (tp + fn + epsilon)
    f1 = 2.0 * precision * recall / (precision + recall + epsilon)
    f1 = jnp.clip(f1, epsilon, 1.0 - epsilon)
    return 1.0 - jnp.mean(f1)


def _f1_loss_ref(y_pred, y_true, *, epsilon=1e-07, num_classes=9):
    """Pure-JAX reference matching the PyTorch module."""
    y_true_oh = jax.nn.one_hot(y_true, num_classes, dtype=jnp.float32)
    p = jax.nn.softmax(y_pred.astype(jnp.float32), axis=1)
    tp = jnp.sum(y_true_oh * p, axis=0)
    fp = jnp.sum((1.0 - y_true_oh) * p, axis=0)
    fn = jnp.sum(y_true_oh * (1.0 - p), axis=0)
    precision = tp / (tp + fp + epsilon)
    recall = tp / (tp + fn + epsilon)
    f1 = 2.0 * precision * recall / (precision + recall + epsilon)
    f1 = jnp.clip(f1, epsilon, 1.0 - epsilon)
    return 1.0 - jnp.mean(f1)


if __name__ == "__main__":
    num_classes = 9
    batch = 16

    key = jax.random.PRNGKey(0)
    k_pred, k_true = jax.random.split(key)
    y_pred = jax.random.normal(k_pred, (batch, num_classes), dtype=jnp.float32)
    y_true = jax.random.randint(k_true, (batch,), 0, num_classes, dtype=jnp.int32)

    loss = jax.block_until_ready(f1_loss(y_pred, y_true, num_classes=num_classes))
    ref = _f1_loss_ref(y_pred, y_true, num_classes=num_classes)
    assert jnp.allclose(loss, ref, atol=1e-5, rtol=1e-5), (loss, ref)

    # Exercise the multi-block, multi-core, ragged-tail masked path.
    batch2 = 700
    k_pred2, k_true2 = jax.random.split(jax.random.PRNGKey(1))
    y_pred2 = jax.random.normal(k_pred2, (batch2, num_classes), dtype=jnp.float32)
    y_true2 = jax.random.randint(k_true2, (batch2,), 0, num_classes, dtype=jnp.int32)
    loss2 = jax.block_until_ready(
        f1_loss(y_pred2, y_true2, num_classes=num_classes, block_n=256))
    ref2 = _f1_loss_ref(y_pred2, y_true2, num_classes=num_classes)
    assert jnp.allclose(loss2, ref2, atol=1e-5, rtol=1e-5), (loss2, ref2)

    print("KERNEL_OK")
</pallas_src>

<mosaic_0001>
module attributes {stable_mosaic.version = 11 : i64} {
  func.func @_f1_loss_kernel(%arg0: i32, %arg1: i32, %arg2: memref<9x256xf32, #tpu.memory_space<vmem>>, %arg3: memref<1x256xi32, #tpu.memory_space<vmem>>, %arg4: memref<1x9x256xf32, #tpu.memory_space<vmem>>, %arg5: memref<1x9x256xf32, #tpu.memory_space<vmem>>, %arg6: memref<1x9x256xf32, #tpu.memory_space<vmem>>) attributes {dimension_semantics = [#tpu.dimension_semantics<parallel>, #tpu.dimension_semantics<arbitrary>], iteration_bounds = array<i64: 2, 1>, scalar_prefetch = 0 : i64, scratch_operands = 0 : i64, tpu.core_type = #tpu.core_type<tc>, window_params = [{transform_indices = @transform_0, window_bounds = array<i64: 9, 256>}, {transform_indices = @transform_1, window_bounds = array<i64: 1, 256>}, {transform_indices = @transform_2, window_bounds = array<i64: 1, 9, 256>}, {transform_indices = @transform_3, window_bounds = array<i64: 1, 9, 256>}, {transform_indices = @transform_4, window_bounds = array<i64: 1, 9, 256>}]} {
    %c0_i32 = arith.constant 0 : i32
    %0 = arith.cmpi eq, %arg1, %c0_i32 : i32
    %1 = arith.extui %0 : i1 to i32
    %c0_i32_0 = arith.constant 0 : i32
    %2 = arith.cmpi ne, %1, %c0_i32_0 : i32
    scf.if %2 {
      %cst_26 = arith.constant 0.000000e+00 : f32
      %59 = vector.broadcast %cst_26 : f32 to vector<9x256xf32>
      %c0_27 = arith.constant 0 : index
      %c0_28 = arith.constant 0 : index
      %c0_29 = arith.constant 0 : index
      %60 = vector.load %arg4[%c0_27, %c0_28, %c0_29] : memref<1x9x256xf32, #tpu.memory_space<vmem>>, vector<1x9x256xf32>
      %61 = vector.shape_cast %60 : vector<1x9x256xf32> to vector<9x256xf32>
      %62 = vector.shape_cast %59 : vector<9x256xf32> to vector<1x9x256xf32>
      tpu.vector_store %arg4[%c0_27, %c0_28, %c0_29], %62 {strides = array<i32>} : memref<1x9x256xf32, #tpu.memory_space<vmem>>, vector<1x9x256xf32>,
      %cst_30 = arith.constant 0.000000e+00 : f32
      %63 = vector.broadcast %cst_30 : f32 to vector<9x256xf32>
      %c0_31 = arith.constant 0 : index
      %c0_32 = arith.constant 0 : index
      %c0_33 = arith.constant 0 : index
      %64 = vector.load %arg5[%c0_31, %c0_32, %c0_33] : memref<1x9x256xf32, #tpu.memory_space<vmem>>, vector<1x9x256xf32>
      %65 = vector.shape_cast %64 : vector<1x9x256xf32> to vector<9x256xf32>
      %66 = vector.shape_cast %63 : vector<9x256xf32> to vector<1x9x256xf32>
      tpu.vector_store %arg5[%c0_31, %c0_32, %c0_33], %66 {strides = array<i32>} : memref<1x9x256xf32, #tpu.memory_space<vmem>>, vector<1x9x256xf32>,
      %cst_34 = arith.constant 0.000000e+00 : f32
      %67 = vector.broadcast %cst_34 : f32 to vector<9x256xf32>
      %c0_35 = arith.constant 0 : index
      %c0_36 = arith.constant 0 : index
      %c0_37 = arith.constant 0 : index
      %68 = vector.load %arg6[%c0_35, %c0_36, %c0_37] : memref<1x9x256xf32, #tpu.memory_space<vmem>>, vector<1x9x256xf32>
      %69 = vector.shape_cast %68 : vector<1x9x256xf32> to vector<9x256xf32>
      %70 = vector.shape_cast %67 : vector<9x256xf32> to vector<1x9x256xf32>
      tpu.vector_store %arg6[%c0_35, %c0_36, %c0_37], %70 {strides = array<i32>} : memref<1x9x256xf32, #tpu.memory_space<vmem>>, vector<1x9x256xf32>,
    } else {
    }
    %c1_i32 = arith.constant 1 : i32
    %3 = arith.muli %arg0, %c1_i32 : i32
    %4 = arith.addi %3, %arg1 : i32
    %c256_i32 = arith.constant 256 : i32
    %5 = arith.muli %4, %c256_i32 : i32
    %6 = tpu.iota {dimensions = array<i32: 1>} : vector<1x256xi32>
    %7 = tpu.iota {dimensions = array<i32: 0>} : vector<9x256xi32>
    %c0_i32_1 = arith.constant 0 : i32
    %c256_i32_2 = arith.constant 256 : i32
    %8 = arith.muli %c0_i32_1, %c256_i32_2 : i32
    %9 = tpu.assume_multiple %8, 256 : i32
    %c0 = arith.constant 0 : index
    %10 = arith.index_cast %9 : i32 to index
    %11 = vector.load %arg2[%c0, %10] : memref<9x256xf32, #tpu.memory_space<vmem>>, vector<9x256xf32>
    %c0_3 = arith.constant 0 : index
    %12 = arith.index_cast %9 : i32 to index
    %13 = vector.load %arg3[%c0_3, %12] : memref<1x256xi32, #tpu.memory_space<vmem>>, vector<1x256xi32>
    %14 = arith.addi %5, %9 : i32
    %15 = vector.broadcast %14 : i32 to vector<1x256xi32>
    %16 = arith.addi %15, %6 : vector<1x256xi32>
    %c16_i32 = arith.constant 16 : i32
    %17 = vector.broadcast %c16_i32 : i32 to vector<1x256xi32>
    %18 = arith.cmpi slt, %16, %17 : vector<1x256xi32>
    %cst = arith.constant dense<0xFF800000> : vector<256xf32>
    %19 = vector.multi_reduction <maximumf>, %11, %cst [0] : vector<9x256xf32> to vector<256xf32>
    %20 = vector.shape_cast %19 : vector<256xf32> to vector<1x256xf32>
    %21 = vector.broadcast %20 : vector<1x256xf32> to vector<9x256xf32>
    %22 = arith.subf %11, %21 : vector<9x256xf32>
    %23 = math.exp %22 : vector<9x256xf32>
    %cst_4 = arith.constant dense<0.000000e+00> : vector<256xf32>
    %24 = vector.multi_reduction <add>, %23, %cst_4 [0] : vector<9x256xf32> to vector<256xf32>
    %25 = vector.shape_cast %24 : vector<256xf32> to vector<1x256xf32>
    %26 = tpu.reciprocal %25 : vector<1x256xf32> -> vector<1x256xf32>
    %27 = vector.broadcast %26 : vector<1x256xf32> to vector<9x256xf32>
    %28 = arith.mulf %23, %27 : vector<9x256xf32>
    %cst_5 = arith.constant 0.000000e+00 : f32
    %29 = vector.shape_cast %18 : vector<1x256xi1> to vector<1x256xi1>
    %30 = vector.broadcast %29 : vector<1x256xi1> to vector<9x256xi1>
    %31 = vector.broadcast %cst_5 : f32 to vector<9x256xf32>
    %32 = arith.select %30, %28, %31 : vector<9x256xi1>, vector<9x256xf32>
    %33 = vector.broadcast %13 : vector<1x256xi32> to vector<9x256xi32>
    %34 = arith.cmpi eq, %7, %33 : vector<9x256xi32>
    %35 = vector.broadcast %18 : vector<1x256xi1> to vector<9x256xi1>
    %36 = arith.andi %34, %35 : vector<9x256xi1>
    %c0_6 = arith.constant 0 : index
    %c0_7 = arith.constant 0 : index
    %c0_8 = arith.constant 0 : index
    %37 = vector.load %arg4[%c0_6, %c0_7, %c0_8] : memref<1x9x256xf32, #tpu.memory_space<vmem>>, vector<1x9x256xf32>
    %38 = vector.shape_cast %37 : vector<1x9x256xf32> to vector<9x256xf32>
    %cst_9 = arith.constant 0.000000e+00 : f32
    %39 = vector.broadcast %cst_9 : f32 to vector<9x256xf32>
    %40 = arith.select %36, %32, %39 : vector<9x256xi1>, vector<9x256xf32>
    %41 = arith.addf %38, %40 : vector<9x256xf32>
    %c0_10 = arith.constant 0 : index
    %c0_11 = arith.constant 0 : index
    %c0_12 = arith.constant 0 : index
    %42 = vector.load %arg4[%c0_10, %c0_11, %c0_12] : memref<1x9x256xf32, #tpu.memory_space<vmem>>, vector<1x9x256xf32>
    %43 = vector.shape_cast %42 : vector<1x9x256xf32> to vector<9x256xf32>
    %44 = vector.shape_cast %41 : vector<9x256xf32> to vector<1x9x256xf32>
    tpu.vector_store %arg4[%c0_10, %c0_11, %c0_12], %44 {strides = array<i32>} : memref<1x9x256xf32, #tpu.memory_space<vmem>>, vector<1x9x256xf32>,
    %c0_13 = arith.constant 0 : index
    %c0_14 = arith.constant 0 : index
    %c0_15 = arith.constant 0 : index
    %45 = vector.load %arg5[%c0_13, %c0_14, %c0_15] : memref<1x9x256xf32, #tpu.memory_space<vmem>>, vector<1x9x256xf32>
    %46 = vector.shape_cast %45 : vector<1x9x256xf32> to vector<9x256xf32>
    %47 = arith.addf %46, %32 : vector<9x256xf32>
    %c0_16 = arith.constant 0 : index
    %c0_17 = arith.constant 0 : index
    %c0_18 = arith.constant 0 : index
    %48 = vector.load %arg5[%c0_16, %c0_17, %c0_18] : memref<1x9x256xf32, #tpu.memory_space<vmem>>, vector<1x9x256xf32>
    %49 = vector.shape_cast %48 : vector<1x9x256xf32> to vector<9x256xf32>
    %50 = vector.shape_cast %47 : vector<9x256xf32> to vector<1x9x256xf32>
    tpu.vector_store %arg5[%c0_16, %c0_17, %c0_18], %50 {strides = array<i32>} : memref<1x9x256xf32, #tpu.memory_space<vmem>>, vector<1x9x256xf32>,
    %c0_19 = arith.constant 0 : index
    %c0_20 = arith.constant 0 : index
    %c0_21 = arith.constant 0 : index
    %51 = vector.load %arg6[%c0_19, %c0_20, %c0_21] : memref<1x9x256xf32, #tpu.memory_space<vmem>>, vector<1x9x256xf32>
    %52 = vector.shape_cast %51 : vector<1x9x256xf32> to vector<9x256xf32>
    %53 = arith.extui %36 : vector<9x256xi1> to vector<9x256xi32>
    %54 = arith.sitofp %53 : vector<9x256xi32> to vector<9x256xf32>
    %55 = arith.addf %52, %54 : vector<9x256xf32>
    %c0_22 = arith.constant 0 : index
    %c0_23 = arith.constant 0 : index
    %c0_24 = arith.constant 0 : index
    %56 = vector.load %arg6[%c0_22, %c0_23, %c0_24] : memref<1x9x256xf32, #tpu.memory_space<vmem>>, vector<1x9x256xf32>
    %57 = vector.shape_cast %56 : vector<1x9x256xf32> to vector<9x256xf32>
    %58 = vector.shape_cast %55 : vector<9x256xf32> to vector<1x9x256xf32>
    tpu.vector_store %arg6[%c0_22, %c0_23, %c0_24], %58 {strides = array<i32>} : memref<1x9x256xf32, #tpu.memory_space<vmem>>, vector<1x9x256xf32>,
    %c1_i32_25 = arith.constant 1 : i32
    return
  }
  func.func @transform_0(%arg0: i32, %arg1: i32) -> (i32, i32) {
    %c1_i32 = arith.constant 1 : i32
    %0 = arith.muli %arg0, %c1_i32 : i32
    %1 = arith.addi %0, %arg1 : i32
    %c0_i32 = arith.constant 0 : i32
    %c0_i32_0 = arith.constant 0 : i32
    return %c0_i32, %1 : i32, i32
  }
  func.func @transform_1(%arg0: i32, %arg1: i32) -> (i32, i32) {
    %c1_i32 = arith.constant 1 : i32
    %0 = arith.muli %arg0, %c1_i32 : i32
    %1 = arith.addi %0, %arg1 : i32
    %c0_i32 = arith.constant 0 : i32
    %c0_i32_0 = arith.constant 0 : i32
    return %c0_i32, %1 : i32, i32
  }
  func.func @transform_2(%arg0: i32, %arg1: i32) -> (i32, i32, i32) {
    %c0_i32 = arith.constant 0 : i32
    %c0_i32_0 = arith.constant 0 : i32
    %c0_i32_1 = arith.constant 0 : i32
    return %arg0, %c0_i32, %c0_i32_0 : i32, i32, i32
  }
  func.func @transform_3(%arg0: i32, %arg1: i32) -> (i32, i32, i32) {
    %c0_i32 = arith.constant 0 : i32
    %c0_i32_0 = arith.constant 0 : i32
    %c0_i32_1 = arith.constant 0 : i32
    return %arg0, %c0_i32, %c0_i32_0 : i32, i32, i32
  }
  func.func @transform_4(%arg0: i32, %arg1: i32) -> (i32, i32, i32) {
    %c0_i32 = arith.constant 0 : i32
    %c0_i32_0 = arith.constant 0 : i32
    %c0_i32_1 = arith.constant 0 : i32
    return %arg0, %c0_i32, %c0_i32_0 : i32, i32, i32
  }
}

</mosaic_0001>

<llo_original>
// kernel: f1_loss.1
$region0: #{f1_loss.1}
  #allocation0 [shape = 'u32[]', space=smem, size = 0x4, offset = 0x4, fixed_abs, tag = 'smem constant byte address 0x4 - core index']
  #allocation1 [shape = 'u32[144,128]{1,0:T(1,128)}', space=vmem, size = 0x12000, scoped, tag = 'internal scratch']
  %s0 = inlined_call_operand.vmem [shape: f32[9,16], index: 0, kind: input, shape index: {}]
  %s1 = inlined_call_operand.vmem [shape: s32[1,16], index: 1, kind: input, shape index: {}]
  %s2 = inlined_call_operand.vmem [shape: f32[2,9,256], index: 2, kind: output, shape index: {0}]
  %s3 = inlined_call_operand.vmem [shape: f32[2,9,256], index: 3, kind: output, shape index: {1}]
  %s4 = inlined_call_operand.vmem [shape: f32[2,9,256], index: 4, kind: output, shape index: {2}]
  %5 = xla_tuple %s2, %s3, %s4
  %s6 = sld [smem:[#allocation0]]
  $region127: #{f1_loss.1} parent=0
    _
  %s8 = ssub.s32 1, %s6
  %s9 = scalar_select 0, %s8, %s6
  $region1: #{f1_loss.1} parent=0
    #allocation2 [shape = 'u8[32768]{0}', space=vmem, size = 0x8000, scoped, tag = 'input window, operand 0']
    loop: start=0, step=1, limit=4
    $region2: #{f1_loss.1} parent=1 // loop_pre_header
      _
    $region3: #{f1_loss.1} parent=1 // loop_header
      %s11 = sphi 0, %s15
      %p12 = scmp.ge.s32.totalorder %s11, 4
      %s18 = sphi 0, %s30
      %s19 = sphi 0, %s26
      %s20 = sphi 0, %s18
      %s21 = sphi 0, %s19
      %s22 = sphi 0, %s20
      %s23 = sphi 0, %s21
      %s35 = sphi 0, %s37
      %s38 = sphi 0, %s35
      %s39 = sphi 0, %s38
      %s55 = sphi 0, %s39
      %s63 = sphi 0, %s65
      %s66 = sphi 0, %s63
      %s67 = sphi 0, %s66
      %s83 = sphi 0, %s67
      %s89 = sphi 0, %s91
      %s92 = sphi 0, %s89
      %s93 = sphi 0, %s92
      %s109 = sphi 0, %s93
      %s115 = sphi 0, %s117
      %s118 = sphi 0, %s115
      %s119 = sphi 0, %s118
      %s135 = sphi 0, %s119
      %s141 = sphi 0, %s143
      %s144 = sphi 0, %s141
      %s145 = sphi 0, %s144
      %s161 = sphi 0, %s145
    $region4: #{f1_loss.1} parent=1 // loop_header_branch
      %14 = sbr.rel (%p12) target = $region8
    $region5: #{f1_loss.1} parent=1 // loop_body
      %s16 = ssub.s32 %s11, 1
      %s17 = ssub.s32 %s11, 2
      %s24 = sadd.s32 1, %s19
      %p25 = scmp.ge.s32.totalorder %s24, 1
      %s26 = scalar_select %p25, 0, %s24
      %s27 = sadd.s32 1, %s18
      %s28 = scalar_select %p25, %s27, %s18
      %p29 = scmp.ge.s32.totalorder %s28, 2
      %s30 = scalar_select %p29, 0, %s28
      %s31 = sadd.s32 %s18, %s19
      %s32 = sadd.s32 %s30, %s26
      %s33 = ssub.s32 %s31, %s32
      %p34 = scmp.eq.s32.totalorder %s33, 0
      %s36 = sadd.s32 %s35, 1
      %s37 = scalar_select %p34, %s35, %s36
      %p40 = pneg %p34
      %p41 = scmp.eq.s32.totalorder %s11, 1
      %p42 = por %p40, %p41
      %p43 = scmp.ne.s32.totalorder %s35, %s38
      %p44 = scmp.eq.s32.totalorder %s11, 0
      %p45 = por %p43, %p44
      %p46 = scmp.ne.s32.totalorder %s35, %s38
      %p47 = scmp.eq.s32.totalorder %s16, 1
      %p48 = por %p46, %p47
      %p49 = scmp.ne.s32.totalorder %s38, %s39
      %p50 = scmp.eq.s32.totalorder %s16, 0
      %p51 = por %p49, %p50
      %p52 = scmp.ne.s32.totalorder %s38, %s39
      %p53 = scmp.eq.s32.totalorder %s17, 1
      %p54 = por %p52, %p53
      %p56 = scmp.ne.s32.totalorder %s39, %s55
      %p57 = scmp.eq.s32.totalorder %s17, 0
      %p58 = por %p56, %p57
      %s59 = sadd.s32 %s18, %s19
      %s60 = sadd.s32 %s30, %s26
      %s61 = ssub.s32 %s59, %s60
      %p62 = scmp.eq.s32.totalorder %s61, 0
      %s64 = sadd.s32 %s63, 1
      %s65 = scalar_select %p62, %s63, %s64
      %p68 = pneg %p62
      %p69 = scmp.eq.s32.totalorder %s11, 1
      %p70 = por %p68, %p69
      %p71 = scmp.ne.s32.totalorder %s63, %s66
      %p72 = scmp.eq.s32.totalorder %s11, 0
      %p73 = por %p71, %p72
      %p74 = scmp.ne.s32.totalorder %s63, %s66
      %p75 = scmp.eq.s32.totalorder %s16, 1
      %p76 = por %p74, %p75
      %p77 = scmp.ne.s32.totalorder %s66, %s67
      %p78 = scmp.eq.s32.totalorder %s16, 0
      %p79 = por %p77, %p78
      %p80 = scmp.ne.s32.totalorder %s66, %s67
      %p81 = scmp.eq.s32.totalorder %s17, 1
      %p82 = por %p80, %p81
      %p84 = scmp.ne.s32.totalorder %s67, %s83
      %p85 = scmp.eq.s32.totalorder %s17, 0
      %p86 = por %p84, %p85
      %s87 = ssub.s32 %s18, %s30
      %p88 = scmp.eq.s32.totalorder %s87, 0
      %s90 = sadd.s32 %s89, 1
      %s91 = scalar_select %p88, %s89, %s90
      %p94 = pneg %p88
      %p95 = scmp.eq.s32.totalorder %s11, 1
      %p96 = por %p94, %p95
      %p97 = scmp.ne.s32.totalorder %s89, %s92
      %p98 = scmp.eq.s32.totalorder %s11, 0
      %p99 = por %p97, %p98
      %p100 = scmp.ne.s32.totalorder %s89, %s92
      %p101 = scmp.eq.s32.totalorder %s16, 1
      %p102 = por %p100, %p101
      %p103 = scmp.ne.s32.totalorder %s92, %s93
      %p104 = scmp.eq.s32.totalorder %s16, 0
      %p105 = por %p103, %p104
      %p106 = scmp.ne.s32.totalorder %s92, %s93
      %p107 = scmp.eq.s32.totalorder %s17, 1
      %p108 = por %p106, %p107
      %p110 = scmp.ne.s32.totalorder %s93, %s109
      %p111 = scmp.eq.s32.totalorder %s17, 0
      %p112 = por %p110, %p111
      %s113 = ssub.s32 %s18, %s30
      %p114 = scmp.eq.s32.totalorder %s113, 0
      %s116 = sadd.s32 %s115, 1
      %s117 = scalar_select %p114, %s115, %s116
      %p120 = pneg %p114
      %p121 = scmp.eq.s32.totalorder %s11, 1
      %p122 = por %p120, %p121
      %p123 = scmp.ne.s32.totalorder %s115, %s118
      %p124 = scmp.eq.s32.totalorder %s11, 0
      %p125 = por %p123, %p124
      %p126 = scmp.ne.s32.totalorder %s115, %s118
      %p127 = scmp.eq.s32.totalorder %s16, 1
      %p128 = por %p126, %p127
      %p129 = scmp.ne.s32.totalorder %s118, %s119
      %p130 = scmp.eq.s32.totalorder %s16, 0
      %p131 = por %p129, %p130
      %p132 = scmp.ne.s32.totalorder %s118, %s119
      %p133 = scmp.eq.s32.totalorder %s17, 1
      %p134 = por %p132, %p133
      %p136 = scmp.ne.s32.totalorder %s119, %s135
      %p137 = scmp.eq.s32.totalorder %s17, 0
      %p138 = por %p136, %p137
      %s139 = ssub.s32 %s18, %s30
      %p140 = scmp.eq.s32.totalorder %s139, 0
      %s142 = sadd.s32 %s141, 1
      %s143 = scalar_select %p140, %s141, %s142
      %p146 = pneg %p140
      %p147 = scmp.eq.s32.totalorder %s11, 1
      %p148 = por %p146, %p147
      %p149 = scmp.ne.s32.totalorder %s141, %s144
      %p150 = scmp.eq.s32.totalorder %s11, 0
      %p151 = por %p149, %p150
      %p152 = scmp.ne.s32.totalorder %s141, %s144
      %p153 = scmp.eq.s32.totalorder %s16, 1
      %p154 = por %p152, %p153
      %p155 = scmp.ne.s32.totalorder %s144, %s145
      %p156 = scmp.eq.s32.totalorder %s16, 0
      %p157 = por %p155, %p156
      %p158 = scmp.ne.s32.totalorder %s144, %s145
      %p159 = scmp.eq.s32.totalorder %s17, 1
      %p160 = por %p158, %p159
      %p162 = scmp.ne.s32.totalorder %s145, %s161
      %p163 = scmp.eq.s32.totalorder %s17, 0
      %p164 = por %p162, %p163
      %p165 = scmp.le.s32.totalorder 1, %s11
      %p166 = scmp.lt.s32.totalorder %s11, 3
      %p167 = pnand %p165, %p166
      %p168 = pneg %p167
      // Predicated region
      $region9: #{f1_loss.1} parent=5 // pred_check
        _
      $region10: #{f1_loss.1} parent=5 // pred_check_branch
        %170 = sbr.rel (%p167) target = $region12
      $region11: #{f1_loss.1} parent=5 // pred_region
        %s171 = ssub.s32 %s11, 1
      $region12: #{f1_loss.1} parent=5 // pred_fallthru
        _
      %p172 = scmp.lt.s32.totalorder %s11, 2
      // Predicated region
      $region13: #{f1_loss.1} parent=5 // pred_check
        %p173 = pneg %p172
      $region14: #{f1_loss.1} parent=5 // pred_check_branch
        %175 = sbr.rel (%p173) target = $region16
      $region15: #{f1_loss.1} parent=5 // pred_region
        // Predicated region
        $region17: #{f1_loss.1} parent=15 // pred_check
          %p176 = pneg %p45
        $region18: #{f1_loss.1} parent=15 // pred_check_branch
          %178 = sbr.rel (%p176) target = $region20
        $region19: #{f1_loss.1} parent=15 // pred_region
          %s179 = sand.u32 %s35, 1
          %s180 = sand.u32 %s35, 1
          %s181 = smul.addr %s180, 32
          %s182 = scalar_lea.vmem [#allocation2], %s181
          %s183 = sadd.s32 %s18, %s19
          %s184 = smul.u32 2, %s183
          %s185 = ssub.s32 1, %s184
          %s186 = smul.u32 256, %s185
          %p187 = scmp.ne.s32.totalorder 0, %s186
          %s188 = smul.addr %s184, 8
          %s189 = scalar_lea.vmem %s0, %s188
          %s190 = smul.u32 %s185, 8
          // Predicated region
          $region21: #{f1_loss.1} parent=19 // pred_check
            %p191 = pneg %p187
          $region22: #{f1_loss.1} parent=19 // pred_check_branch
            %193 = sbr.rel (%p191) target = $region24
          $region23: #{f1_loss.1} parent=19 // pred_region
            %p194 = scmp.lt.u32.totalorder %s190, 8
            %p195 = pneg %p194
            // Predicated region
            $region25: #{f1_loss.1} parent=23 // pred_check
              _
            $region26: #{f1_loss.1} parent=23 // pred_check_branch
              %197 = sbr.rel (%p194) target = $region28
            $region27: #{f1_loss.1} parent=23 // pred_region
              %s214 = sand.u32 %s190, 7
              %p215 = scmp.eq.s32.totalorder %s214, 0
              // Predicated region
              $region40: #{f1_loss.1} parent=27 // pred_check
                %p216 = pneg %p215
              $region41: #{f1_loss.1} parent=27 // pred_check_branch
                %218 = sbr.rel (%p216) target = $region43
              $region42: #{f1_loss.1} parent=27 // pred_region
                %s219 = sshrl.u32 %s190, 3
                %s220 = sshrl.u32 %s219, 5
                // While loop
                $region44: #{f1_loss.1} parent=42 // loop_pre_header
                  _
                $region45: #{f1_loss.1} parent=42 // loop_header
                  %s224 = sphi 0, %s226
                  %p225 = scmp.ge.s32.totalorder %s224, %s220
                  %s229 = sphi 0, %s362
                  %s230 = sphi %s189, %s365
                  %s231 = sphi %s182, %s366
                $region46: #{f1_loss.1} parent=42 // loop_header_branch
                  %228 = sbr.rel (%p225) target = $region50
                $region47: #{f1_loss.1} parent=42 // loop_body
                  %v232 = vld [vmem:[%s230] sm:$0xff]
                  %233 = vst [vmem:[%s231] sm:$0xff] %v232
                  %v234 = vld [vmem:[%s230 + $0x8] sm:$0xff]
                  %235 = vst [vmem:[%s231 + $0x8] sm:$0xff] %v234
                  %v236 = vld [vmem:[%s230 + $0x10] sm:$0xff]
                  %237 = vst [vmem:[%s231 + $0x10] sm:$0xff] %v236
                  %v238 = vld [vmem:[%s230 + $0x18] sm:$0xff]
                  %239 = vst [vmem:[%s231 + $0x18] sm:$0xff] %v238
                  %v240 = vld [vmem:[%s230 + $0x20] sm:$0xff]
                  %241 = vst [vmem:[%s231 + $0x20] sm:$0xff] %v240
                  %v242 = vld [vmem:[%s230 + $0x28] sm:$0xff]
                  %243 = vst [vmem:[%s231 + $0x28] sm:$0xff] %v242
                  %v244 = vld [vmem:[%s230 + $0x30] sm:$0xff]
                  %245 = vst [vmem:[%s231 + $0x30] sm:$0xff] %v244
                  %v246 = vld [vmem:[%s230 + $0x38] sm:$0xff]
                  %247 = vst [vmem:[%s231 + $0x38] sm:$0xff] %v246
                  %v248 = vld [vmem:[%s230 + $0x40] sm:$0xff]
                  %249 = vst [vmem:[%s231 + $0x40] sm:$0xff] %v248
                  %v250 = vld [vmem:[%s230 + $0x48] sm:$0xff]
                  %251 = vst [vmem:[%s231 + $0x48] sm:$0xff] %v250
                  %v252 = vld [vmem:[%s230 + $0x50] sm:$0xff]
                  %253 = vst [vmem:[%s231 + $0x50] sm:$0xff] %v252
                  %v254 = vld [vmem:[%s230 + $0x58] sm:$0xff]
                  %255 = vst [vmem:[%s231 + $0x58] sm:$0xff] %v254
                  %v256 = vld [vmem:[%s230 + $0x60] sm:$0xff]
                  %257 = vst [vmem:[%s231 + $0x60] sm:$0xff] %v256
                  %v258 = vld [vmem:[%s230 + $0x68] sm:$0xff]
                  %259 = vst [vmem:[%s231 + $0x68] sm:$0xff] %v258
                  %v260 = vld [vmem:[%s230 + $0x70] sm:$0xff]
                  %261 = vst [vmem:[%s231 + $0x70] sm:$0xff] %v260
                  %v262 = vld [vmem:[%s230 + $0x78] sm:$0xff]
                  %263 = vst [vmem:[%s231 + $0x78] sm:$0xff] %v262
                  %v264 = vld [vmem:[%s230 + $0x80] sm:$0xff]
                  %265 = vst [vmem:[%s231 + $0x80] sm:$0xff] %v264
                  %v266 = vld [vmem:[%s230 + $0x88] sm:$0xff]
                  %267 = vst [vmem:[%s231 + $0x88] sm:$0xff] %v266
                  %v268 = vld [vmem:[%s230 + $0x90] sm:$0xff]
                  %269 = vst [vmem:[%s231 + $0x90] sm:$0xff] %v268
                  %v270 = vld [vmem:[%s230 + $0x98] sm:$0xff]
                  %271 = vst [vmem:[%s231 + $0x98] sm:$0xff] %v270
                  %v272 = vld [vmem:[%s230 + $0xa0] sm:$0xff]
                  %273 = vst [vmem:[%s231 + $0xa0] sm:$0xff] %v272
                  %v274 = vld [vmem:[%s230 + $0xa8] sm:$0xff]
                  %275 = vst [vmem:[%s231 + $0xa8] sm:$0xff] %v274
                  %v276 = vld [vmem:[%s230 + $0xb0] sm:$0xff]
                  %277 = vst [vmem:[%s231 + $0xb0] sm:$0xff] %v276
                  %v278 = vld [vmem:[%s230 + $0xb8] sm:$0xff]
                  %279 = vst [vmem:[%s231 + $0xb8] sm:$0xff] %v278
                  %v280 = vld [vmem:[%s230 + $0xc0] sm:$0xff]
                  %281 = vst [vmem:[%s231 + $0xc0] sm:$0xff] %v280
                  %v282 = vld [vmem:[%s230 + $0xc8] sm:$0xff]
                  %283 = vst [vmem:[%s231 + $0xc8] sm:$0xff] %v282
                  %v284 = vld [vmem:[%s230 + $0xd0] sm:$0xff]
                  %285 = vst [vmem:[%s231 + $0xd0] sm:$0xff] %v284
                  %v286 = vld [vmem:[%s230 + $0xd8] sm:$0xff]
                  %287 = vst [vmem:[%s231 + $0xd8] sm:$0xff] %v286
                  %v288 = vld [vmem:[%s230 + $0xe0] sm:$0xff]
                  %289 = vst [vmem:[%s231 + $0xe0] sm:$0xff] %v288
                  %v290 = vld [vmem:[%s230 + $0xe8] sm:$0xff]
                  %291 = vst [vmem:[%s231 + $0xe8] sm:$0xff] %v290
                  %v292 = vld [vmem:[%s230 + $0xf0] sm:$0xff]
                  %293 = vst [vmem:[%s231 + $0xf0] sm:$0xff] %v292
                  %v294 = vld [vmem:[%s230 + $0xf8] sm:$0xff]
                  %295 = vst [vmem:[%s231 + $0xf8] sm:$0xff] %v294
                  %v296 = vld [vmem:[%s230 + $0x8] sm:$0xff]
                  %297 = vst [vmem:[%s231 + $0x10] sm:$0xff] %v296
                  %v298 = vld [vmem:[%s230 + $0x10] sm:$0xff]
                  %299 = vst [vmem:[%s231 + $0x18] sm:$0xff] %v298
                  %v300 = vld [vmem:[%s230 + $0x18] sm:$0xff]
                  %301 = vst [vmem:[%s231 + $0x20] sm:$0xff] %v300
                  %v302 = vld [vmem:[%s230 + $0x20] sm:$0xff]
                  %303 = vst [vmem:[%s231 + $0x28] sm:$0xff] %v302
                  %v304 = vld [vmem:[%s230 + $0x28] sm:$0xff]
                  %305 = vst [vmem:[%s231 + $0x30] sm:$0xff] %v304
                  %v306 = vld [vmem:[%s230 + $0x30] sm:$0xff]
                  %307 = vst [vmem:[%s231 + $0x38] sm:$0xff] %v306
                  %v308 = vld [vmem:[%s230 + $0x38] sm:$0xff]
                  %309 = vst [vmem:[%s231 + $0x40] sm:$0xff] %v308
                  %v310 = vld [vmem:[%s230 + $0x40] sm:$0xff]
                  %311 = vst [vmem:[%s231 + $0x48] sm:$0xff] %v310
                  %v312 = vld [vmem:[%s230 + $0x48] sm:$0xff]
                  %313 = vst [vmem:[%s231 + $0x50] sm:$0xff] %v312
                  %v314 = vld [vmem:[%s230 + $0x50] sm:$0xff]
                  %315 = vst [vmem:[%s231 + $0x58] sm:$0xff] %v314
                  %v316 = vld [vmem:[%s230 + $0x58] sm:$0xff]
                  %317 = vst [vmem:[%s231 + $0x60] sm:$0xff] %v316
                  %v318 = vld [vmem:[%s230 + $0x60] sm:$0xff]
                  %319 = vst [vmem:[%s231 + $0x68] sm:$0xff] %v318
                  %v320 = vld [vmem:[%s230 + $0x68] sm:$0xff]
                  %321 = vst [vmem:[%s231 + $0x70] sm:$0xff] %v320
                  %v322 = vld [vmem:[%s230 + $0x70] sm:$0xff]
                  %323 = vst [vmem:[%s231 + $0x78] sm:$0xff] %v322
                  %v324 = vld [vmem:[%s230 + $0x78] sm:$0xff]
                  %325 = vst [vmem:[%s231 + $0x80] sm:$0xff] %v324
                  %v326 = vld [vmem:[%s230 + $0x80] sm:$0xff]
                  %327 = vst [vmem:[%s231 + $0x88] sm:$0xff] %v326
                  %v328 = vld [vmem:[%s230 + $0x88] sm:$0xff]
                  %329 = vst [vmem:[%s231 + $0x90] sm:$0xff] %v328
                  %v330 = vld [vmem:[%s230 + $0x90] sm:$0xff]
                  %331 = vst [vmem:[%s231 + $0x98] sm:$0xff] %v330
                  %v332 = vld [vmem:[%s230 + $0x98] sm:$0xff]
                  %333 = vst [vmem:[%s231 + $0xa0] sm:$0xff] %v332
                  %v334 = vld [vmem:[%s230 + $0xa0] sm:$0xff]
                  %335 = vst [vmem:[%s231 + $0xa8] sm:$0xff] %v334
                  %v336 = vld [vmem:[%s230 + $0xa8] sm:$0xff]
                  %337 = vst [vmem:[%s231 + $0xb0] sm:$0xff] %v336
                  %v338 = vld [vmem:[%s230 + $0xb0] sm:$0xff]
                  %339 = vst [vmem:[%s231 + $0xb8] sm:$0xff] %v338
                  %v340 = vld [vmem:[%s230 + $0xb8] sm:$0xff]
                  %341 = vst [vmem:[%s231 + $0xc0] sm:$0xff] %v340
                  %v342 = vld [vmem:[%s230 + $0xc0] sm:$0xff]
                  %343 = vst [vmem:[%s231 + $0xc8] sm:$0xff] %v342
                  %v344 = vld [vmem:[%s230 + $0xc8] sm:$0xff]
                  %345 = vst [vmem:[%s231 + $0xd0] sm:$0xff] %v344
                  %v346 = vld [vmem:[%s230 + $0xd0] sm:$0xff]
                  %347 = vst [vmem:[%s231 + $0xd8] sm:$0xff] %v346
                  %v348 = vld [vmem:[%s230 + $0xd8] sm:$0xff]
                  %349 = vst [vmem:[%s231 + $0xe0] sm:$0xff] %v348
                  %v350 = vld [vmem:[%s230 + $0xe0] sm:$0xff]
                  %351 = vst [vmem:[%s231 + $0xe8] sm:$0xff] %v350
                  %v352 = vld [vmem:[%s230 + $0xe8] sm:$0xff]
                  %353 = vst [vmem:[%s231 + $0xf0] sm:$0xff] %v352
                  %v354 = vld [vmem:[%s230 + $0xf0] sm:$0xff]
                  %355 = vst [vmem:[%s231 + $0xf8] sm:$0xff] %v354
                  %v356 = vld [vmem:[%s230 + $0xf8] sm:$0xff]
                  %357 = vst [vmem:[%s231 + $0x100] sm:$0xff] %v356
                  %v358 = vld [vmem:[%s230 + $0x100] sm:$0xff]
                  %359 = vst [vmem:[%s231 + $0x108] sm:$0xff] %v358
                  %s360 = sadd.s32 1, %s229
                  %p361 = scmp.ge.s32.totalorder %s360, %s220
                  %s362 = scalar_select %p361, 0, %s360
                  %s363 = smul.u32 %s362, 256
                  %s364 = smul.u32 %s362, 256
                  %s365 = scalar_lea.vmem %s189, %s363
                  %s366 = scalar_lea.vmem %s182, %s364 [#allocation2]
                $region48: #{f1_loss.1} parent=42 // loop_footer
                  %s226 = sadd.s32 %s224, 1
                $region49: #{f1_loss.1} parent=42 // loop_footer_branch
                  %223 = sbr.rel target = $region45
                $region50: #{f1_loss.1} parent=42 // loop_exit
                  _
                %s367 = sshrl.u32 %s219, 5
                %s368 = sand.u32 %s219, 31
                %s369 = smul.u32 %s367, 32
                %s370 = smul.u32 128, %s369
                %s371 = sshra.s32 %s370, 4
                %s372 = scalar_lea.vmem %s189, %s371
                %s373 = smul.u32 128, %s369
                %s374 = sshra.s32 %s373, 4
                %s375 = scalar_lea.vmem %s182, %s374 [#allocation2]
                // While loop
                $region51: #{f1_loss.1} parent=42 // loop_pre_header
                  _
                $region52: #{f1_loss.1} parent=42 // loop_header
                  %s379 = sphi 0, %s381
                  %p380 = scmp.ge.s32.totalorder %s379, %s368
                  %s384 = sphi 0, %s393
                  %s385 = sphi %s372, %s396
                  %s386 = sphi %s375, %s397
                $region53: #{f1_loss.1} parent=42 // loop_header_branch
                  %383 = sbr.rel (%p380) target = $region57
                $region54: #{f1_loss.1} parent=42 // loop_body
                  %v387 = vld [vmem:[%s385] sm:$0xff]
                  %388 = vst [vmem:[%s386] sm:$0xff] %v387
                  %v389 = vld [vmem:[%s385 + $0x8] sm:$0xff]
                  %390 = vst [vmem:[%s386 + $0x10] sm:$0xff] %v389
                  %s391 = sadd.s32 1, %s384
                  %p392 = scmp.ge.s32.totalorder %s391, %s368
                  %s393 = scalar_select %p392, 0, %s391
                  %s394 = smul.u32 %s393, 8
                  %s395 = smul.u32 %s393, 8
                  %s396 = scalar_lea.vmem %s372, %s394
                  %s397 = scalar_lea.vmem %s375, %s395 [#allocation2]
                $region55: #{f1_loss.1} parent=42 // loop_footer
                  %s381 = sadd.s32 %s379, 1
                $region56: #{f1_loss.1} parent=42 // loop_footer_branch
                  %378 = sbr.rel target = $region52
                $region57: #{f1_loss.1} parent=42 // loop_exit
                  _
              $region43: #{f1_loss.1} parent=27 // pred_fallthru
                _
              %p398 = pneg %p215
              // Predicated region
              $region58: #{f1_loss.1} parent=27 // pred_check
                _
              $region59: #{f1_loss.1} parent=27 // pred_check_branch
                %400 = sbr.rel (%p215) target = $region61
              $region60: #{f1_loss.1} parent=27 // pred_region
                %s401 = sand.u32 %s190, 7
                %s402 = ssub.s32 %s190, %s401
                %s403 = scalar_lea.vmem %s189, %s402
                %s404 = ssub.s32 %s190, %s401
                %s405 = scalar_lea.vmem %s182, %s404 [#allocation2]
                %s406 = sshrl.u32 %s190, 3
                %s407 = sshrl.u32 %s406, 5
                // While loop
                $region62: #{f1_loss.1} parent=60 // loop_pre_header
                  _
                $region63: #{f1_loss.1} parent=60 // loop_header
                  %s411 = sphi 0, %s413
                  %p412 = scmp.ge.s32.totalorder %s411, %s407
                  %s416 = sphi 0, %s549
                  %s417 = sphi %s189, %s552
                  %s418 = sphi %s182, %s553
                $region64: #{f1_loss.1} parent=60 // loop_header_branch
                  %415 = sbr.rel (%p412) target = $region68
                $region65: #{f1_loss.1} parent=60 // loop_body
                  %v419 = vld [vmem:[%s417] sm:$0xff]
                  %420 = vst [vmem:[%s418] sm:$0xff] %v419
                  %v421 = vld [vmem:[%s417 + $0x8] sm:$0xff]
                  %422 = vst [vmem:[%s418 + $0x8] sm:$0xff] %v421
                  %v423 = vld [vmem:[%s417 + $0x10] sm:$0xff]
                  %424 = vst [vmem:[%s418 + $0x10] sm:$0xff] %v423
                  %v425 = vld [vmem:[%s417 + $0x18] sm:$0xff]
                  %426 = vst [vmem:[%s418 + $0x18] sm:$0xff] %v425
                  %v427 = vld [vmem:[%s417 + $0x20] sm:$0xff]
                  %428 = vst [vmem:[%s418 + $0x20] sm:$0xff] %v427
                  %v429 = vld [vmem:[%s417 + $0x28] sm:$0xff]
                  %430 = vst [vmem:[%s418 + $0x28] sm:$0xff] %v429
                  %v431 = vld [vmem:[%s417 + $0x30] sm:$0xff]
                  %432 = vst [vmem:[%s418 + $0x30] sm:$0xff] %v431
                  %v433 = vld [vmem:[%s417 + $0x38] sm:$0xff]
                  %434 = vst [vmem:[%s418 + $0x38] sm:$0xff] %v433
                  %v435 = vld [vmem:[%s417 + $0x40] sm:$0xff]
                  %436 = vst [vmem:[%s418 + $0x40] sm:$0xff] %v435
                  %v437 = vld [vmem:[%s417 + $0x48] sm:$0xff]
                  %438 = vst [vmem:[%s418 + $0x48] sm:$0xff] %v437
                  %v439 = vld [vmem:[%s417 + $0x50] sm:$0xff]
                  %440 = vst [vmem:[%s418 + $0x50] sm:$0xff] %v439
                  %v441 = vld [vmem:[%s417 + $0x58] sm:$0xff]
                  %442 = vst [vmem:[%s418 + $0x58] sm:$0xff] %v441
                  %v443 = vld [vmem:[%s417 + $0x60] sm:$0xff]
                  %444 = vst [vmem:[%s418 + $0x60] sm:$0xff] %v443
                  %v445 = vld [vmem:[%s417 + $0x68] sm:$0xff]
                  %446 = vst [vmem:[%s418 + $0x68] sm:$0xff] %v445
                  %v447 = vld [vmem:[%s417 + $0x70] sm:$0xff]
                  %448 = vst [vmem:[%s418 + $0x70] sm:$0xff] %v447
                  %v449 = vld [vmem:[%s417 + $0x78] sm:$0xff]
                  %450 = vst [vmem:[%s418 + $0x78] sm:$0xff] %v449
                  %v451 = vld [vmem:[%s417 + $0x80] sm:$0xff]
                  %452 = vst [vmem:[%s418 + $0x80] sm:$0xff] %v451
                  %v453 = vld [vmem:[%s417 + $0x88] sm:$0xff]
                  %454 = vst [vmem:[%s418 + $0x88] sm:$0xff] %v453
                  %v455 = vld [vmem:[%s417 + $0x90] sm:$0xff]
                  %456 = vst [vmem:[%s418 + $0x90] sm:$0xff] %v455
                  %v457 = vld [vmem:[%s417 + $0x98] sm:$0xff]
                  %458 = vst [vmem:[%s418 + $0x98] sm:$0xff] %v457
                  %v459 = vld [vmem:[%s417 + $0xa0] sm:$0xff]
                  %460 = vst [vmem:[%s418 + $0xa0] sm:$0xff] %v459
                  %v461 = vld [vmem:[%s417 + $0xa8] sm:$0xff]
                  %462 = vst [vmem:[%s418 + $0xa8] sm:$0xff] %v461
                  %v463 = vld [vmem:[%s417 + $0xb0] sm:$0xff]
                  %464 = vst [vmem:[%s418 + $0xb0] sm:$0xff] %v463
                  %v465 = vld [vmem:[%s417 + $0xb8] sm:$0xff]
                  %466 = vst [vmem:[%s418 + $0xb8] sm:$0xff] %v465
                  %v467 = vld [vmem:[%s417 + $0xc0] sm:$0xff]
                  %468 = vst [vmem:[%s418 + $0xc0] sm:$0xff] %v467
                  %v469 = vld [vmem:[%s417 + $0xc8] sm:$0xff]
                  %470 = vst [vmem:[%s418 + $0xc8] sm:$0xff] %v469
                  %v471 = vld [vmem:[%s417 + $0xd0] sm:$0xff]
                  %472 = vst [vmem:[%s418 + $0xd0] sm:$0xff] %v471
                  %v473 = vld [vmem:[%s417 + $0xd8] sm:$0xff]
                  %474 = vst [vmem:[%s418 + $0xd8] sm:$0xff] %v473
                  %v475 = vld [vmem:[%s417 + $0xe0] sm:$0xff]
                  %476 = vst [vmem:[%s418 + $0xe0] sm:$0xff] %v475
                  %v477 = vld [vmem:[%s417 + $0xe8] sm:$0xff]
                  %478 = vst [vmem:[%s418 + $0xe8] sm:$0xff] %v477
                  %v479 = vld [vmem:[%s417 + $0xf0] sm:$0xff]
                  %480 = vst [vmem:[%s418 + $0xf0] sm:$0xff] %v479
                  %v481 = vld [vmem:[%s417 + $0xf8] sm:$0xff]
                  %482 = vst [vmem:[%s418 + $0xf8] sm:$0xff] %v481
                  %v483 = vld [vmem:[%s417 + $0x8] sm:$0xff]
                  %484 = vst [vmem:[%s418 + $0x10] sm:$0xff] %v483
                  %v485 = vld [vmem:[%s417 + $0x10] sm:$0xff]
                  %486 = vst [vmem:[%s418 + $0x18] sm:$0xff] %v485
                  %v487 = vld [vmem:[%s417 + $0x18] sm:$0xff]
                  %488 = vst [vmem:[%s418 + $0x20] sm:$0xff] %v487
                  %v489 = vld [vmem:[%s417 + $0x20] sm:$0xff]
                  %490 = vst [vmem:[%s418 + $0x28] sm:$0xff] %v489
                  %v491 = vld [vmem:[%s417 + $0x28] sm:$0xff]
                  %492 = vst [vmem:[%s418 + $0x30] sm:$0xff] %v491
                  %v493 = vld [vmem:[%s417 + $0x30] sm:$0xff]
                  %494 = vst [vmem:[%s418 + $0x38] sm:$0xff] %v493
                  %v495 = vld [vmem:[%s417 + $0x38] sm:$0xff]
                  %496 = vst [vmem:[%s418 + $0x40] sm:$0xff] %v495
                  %v497 = vld [vmem:[%s417 + $0x40] sm:$0xff]
                  %498 = vst [vmem:[%s418 + $0x48] sm:$0xff] %v497
                  %v499 = vld [vmem:[%s417 + $0x48] sm:$0xff]
                  %500 = vst [vmem:[%s418 + $0x50] sm:$0xff] %v499
                  %v501 = vld [vmem:[%s417 + $0x50] sm:$0xff]
                  %502 = vst [vmem:[%s418 + $0x58] sm:$0xff] %v501
                  %v503 = vld [vmem:[%s417 + $0x58] sm:$0xff]
                  %504 = vst [vmem:[%s418 + $0x60] sm:$0xff] %v503
                  %v505 = vld [vmem:[%s417 + $0x60] sm:$0xff]
                  %506 = vst [vmem:[%s418 + $0x68] sm:$0xff] %v505
                  %v507 = vld [vmem:[%s417 + $0x68] sm:$0xff]
                  %508 = vst [vmem:[%s418 + $0x70] sm:$0xff] %v507
                  %v509 = vld [vmem:[%s417 + $0x70] sm:$0xff]
                  %510 = vst [vmem:[%s418 + $0x78] sm:$0xff] %v509
                  %v511 = vld [vmem:[%s417 + $0x78] sm:$0xff]
                  %512 = vst [vmem:[%s418 + $0x80] sm:$0xff] %v511
                  %v513 = vld [vmem:[%s417 + $0x80] sm:$0xff]
                  %514 = vst [vmem:[%s418 + $0x88] sm:$0xff] %v513
                  %v515 = vld [vmem:[%s417 + $0x88] sm:$0xff]
                  %516 = vst [vmem:[%s418 + $0x90] sm:$0xff] %v515
                  %v517 = vld [vmem:[%s417 + $0x90] sm:$0xff]
                  %518 = vst [vmem:[%s418 + $0x98] sm:$0xff] %v517
                  %v519 = vld [vmem:[%s417 + $0x98] sm:$0xff]
                  %520 = vst [vmem:[%s418 + $0xa0] sm:$0xff] %v519
                  %v521 = vld [vmem:[%s417 + $0xa0] sm:$0xff]
                  %522 = vst [vmem:[%s418 + $0xa8] sm:$0xff] %v521
                  %v523 = vld [vmem:[%s417 + $0xa8] sm:$0xff]
                  %524 = vst [vmem:[%s418 + $0xb0] sm:$0xff] %v523
                  %v525 = vld [vmem:[%s417 + $0xb0] sm:$0xff]
                  %526 = vst [vmem:[%s418 + $0xb8] sm:$0xff] %v525
                  %v527 = vld [vmem:[%s417 + $0xb8] sm:$0xff]
                  %528 = vst [vmem:[%s418 + $0xc0] sm:$0xff] %v527
                  %v529 = vld [vmem:[%s417 + $0xc0] sm:$0xff]
                  %530 = vst [vmem:[%s418 + $0xc8] sm:$0xff] %v529
                  %v531 = vld [vmem:[%s417 + $0xc8] sm:$0xff]
                  %532 = vst [vmem:[%s418 + $0xd0] sm:$0xff] %v531
                  %v533 = vld [vmem:[%s417 + $0xd0] sm:$0xff]
                  %534 = vst [vmem:[%s418 + $0xd8] sm:$0xff] %v533
                  %v535 = vld [vmem:[%s417 + $0xd8] sm:$0xff]
                  %536 = vst [vmem:[%s418 + $0xe0] sm:$0xff] %v535
                  %v537 = vld [vmem:[%s417 + $0xe0] sm:$0xff]
                  %538 = vst [vmem:[%s418 + $0xe8] sm:$0xff] %v537
                  %v539 = vld [vmem:[%s417 + $0xe8] sm:$0xff]
                  %540 = vst [vmem:[%s418 + $0xf0] sm:$0xff] %v539
                  %v541 = vld [vmem:[%s417 + $0xf0] sm:$0xff]
                  %542 = vst [vmem:[%s418 + $0xf8] sm:$0xff] %v541
                  %v543 = vld [vmem:[%s417 + $0xf8] sm:$0xff]
                  %544 = vst [vmem:[%s418 + $0x100] sm:$0xff] %v543
                  %v545 = vld [vmem:[%s417 + $0x100] sm:$0xff]
                  %546 = vst [vmem:[%s418 + $0x108] sm:$0xff] %v545
                  %s547 = sadd.s32 1, %s416
                  %p548 = scmp.ge.s32.totalorder %s547, %s407
                  %s549 = scalar_select %p548, 0, %s547
                  %s550 = smul.u32 %s549, 256
                  %s551 = smul.u32 %s549, 256
                  %s552 = scalar_lea.vmem %s189, %s550
                  %s553 = scalar_lea.vmem %s182, %s551 [#allocation2]
                $region66: #{f1_loss.1} parent=60 // loop_footer
                  %s413 = sadd.s32 %s411, 1
                $region67: #{f1_loss.1} parent=60 // loop_footer_branch
                  %410 = sbr.rel target = $region63
                $region68: #{f1_loss.1} parent=60 // loop_exit
                  _
                %s554 = sshrl.u32 %s406, 5
                %s555 = sand.u32 %s406, 31
                %s556 = smul.u32 %s554, 32
                %s557 = smul.u32 128, %s556
                %s558 = sshra.s32 %s557, 4
                %s559 = scalar_lea.vmem %s189, %s558
                %s560 = smul.u32 128, %s556
                %s561 = sshra.s32 %s560, 4
                %s562 = scalar_lea.vmem %s182, %s561 [#allocation2]
                // While loop
                $region69: #{f1_loss.1} parent=60 // loop_pre_header
                  _
                $region70: #{f1_loss.1} parent=60 // loop_header
                  %s566 = sphi 0, %s568
                  %p567 = scmp.ge.s32.totalorder %s566, %s555
                  %s571 = sphi 0, %s580
                  %s572 = sphi %s559, %s583
                  %s573 = sphi %s562, %s584
                $region71: #{f1_loss.1} parent=60 // loop_header_branch
                  %570 = sbr.rel (%p567) target = $region75
                $region72: #{f1_loss.1} parent=60 // loop_body
                  %v574 = vld [vmem:[%s572] sm:$0xff]
                  %575 = vst [vmem:[%s573] sm:$0xff] %v574
                  %v576 = vld [vmem:[%s572 + $0x8] sm:$0xff]
                  %577 = vst [vmem:[%s573 + $0x10] sm:$0xff] %v576
                  %s578 = sadd.s32 1, %s571
                  %p579 = scmp.ge.s32.totalorder %s578, %s555
                  %s580 = scalar_select %p579, 0, %s578
                  %s581 = smul.u32 %s580, 8
                  %s582 = smul.u32 %s580, 8
                  %s583 = scalar_lea.vmem %s559, %s581
                  %s584 = scalar_lea.vmem %s562, %s582 [#allocation2]
                $region73: #{f1_loss.1} parent=60 // loop_footer
                  %s568 = sadd.s32 %s566, 1
                $region74: #{f1_loss.1} parent=60 // loop_footer_branch
                  %565 = sbr.rel target = $region70
                $region75: #{f1_loss.1} parent=60 // loop_exit
                  _
                %s585 = sshllo.u32 0, %s401
                loop: start=0, step=1, limit=1
                $region76: #{f1_loss.1} parent=60 // loop_pre_header
                  _
                $region77: #{f1_loss.1} parent=60 // loop_header
                  %s587 = sphi 0, %s591
                  %p588 = scmp.ge.s32.totalorder %s587, 1
                  %s592 = sphi %s403, %s403
                  %s593 = sphi %s405, %s405
                $region78: #{f1_loss.1} parent=60 // loop_header_branch
                  %590 = sbr.rel (%p588) target = $region82
                $region79: #{f1_loss.1} parent=60 // loop_body
                  %v594 = vld [vmem:[%s592] sm:%s585]
                  %595 = vst [vmem:[%s593] sm:%s585] %v594
                  %v596 = vld [vmem:[%s592 + $0x8] sm:%s585]
                  %597 = vst [vmem:[%s593 + $0x10] sm:%s585] %v596
                $region80: #{f1_loss.1} parent=60 // loop_footer
                  %s591 = sadd.s32 1, %s587
                $region81: #{f1_loss.1} parent=60 // loop_footer_branch
                  %586 = sbr.rel target = $region77
                $region82: #{f1_loss.1} parent=60 // loop_exit
                  _
              $region61: #{f1_loss.1} parent=27 // pred_fallthru
                _
            $region28: #{f1_loss.1} parent=23 // pred_fallthru
              _
            // Predicated region
            $region29: #{f1_loss.1} parent=23 // pred_check
              %p198 = pneg %p194
            $region30: #{f1_loss.1} parent=23 // pred_check_branch
              %200 = sbr.rel (%p198) target = $region32
            $region31: #{f1_loss.1} parent=23 // pred_region
              %s201 = sshllo.u32 0, %s190
              loop: start=0, step=1, limit=1
              $region33: #{f1_loss.1} parent=31 // loop_pre_header
                _
              $region34: #{f1_loss.1} parent=31 // loop_header
                %s203 = sphi 0, %s207
                %p204 = scmp.ge.s32.totalorder %s203, 1
                %s208 = sphi %s189, %s189
                %s209 = sphi %s182, %s182
              $region35: #{f1_loss.1} parent=31 // loop_header_branch
                %206 = sbr.rel (%p204) target = $region39
              $region36: #{f1_loss.1} parent=31 // loop_body
                %v210 = vld [vmem:[%s208] sm:%s201]
                %211 = vst [vmem:[%s209] sm:%s201] %v210
                %v212 = vld [vmem:[%s208 + $0x8] sm:%s201]
                %213 = vst [vmem:[%s209 + $0x10] sm:%s201] %v212
              $region37: #{f1_loss.1} parent=31 // loop_footer
                %s207 = sadd.s32 1, %s203
              $region38: #{f1_loss.1} parent=31 // loop_footer_branch
                %202 = sbr.rel target = $region34
              $region39: #{f1_loss.1} parent=31 // loop_exit
                _
            $region32: #{f1_loss.1} parent=23 // pred_fallthru
              _
          $region24: #{f1_loss.1} parent=19 // pred_fallthru
            _
          %598 = vnop
        $region20: #{f1_loss.1} parent=15 // pred_fallthru
          _
        // Predicated region
        $region83: #{f1_loss.1} parent=15 // pred_check
          %p599 = pneg %p73
        $region84: #{f1_loss.1} parent=15 // pred_check_branch
          %601 = sbr.rel (%p599) target = $region86
        $region85: #{f1_loss.1} parent=15 // pred_region
          %s602 = sadd.s32 %s18, %s19
          %s603 = smul.u32 2, %s602
          %s604 = ssub.s32 1, %s603
          %s605 = smul.u32 16, %s604
          %p606 = scmp.lt.s32.totalorder %s603, 0
          %s607 = scalar_select %p606, %s603, 0
          %s608 = scalar_lea.vmem %s1, %s607
          %s609 = sadd.s32 %s18, %s19
          %s610 = smul.u32 2, %s609
          %s611 = ssub.s32 1, %s610
          %s612 = smul.u32 16, %s611
        $region86: #{f1_loss.1} parent=15 // pred_fallthru
          _
      $region16: #{f1_loss.1} parent=5 // pred_fallthru
        _
      %p613 = scmp.le.s32.totalorder 1, %s11
      %p614 = scmp.lt.s32.totalorder %s11, 3
      %p615 = pnand %p613, %p614
      %p616 = pneg %p615
      // Predicated region
      $region87: #{f1_loss.1} parent=5 // pred_check
        _
      $region88: #{f1_loss.1} parent=5 // pred_check_branch
        %618 = sbr.rel (%p615) target = $region90
      $region89: #{f1_loss.1} parent=5 // pred_region
        %s619 = ssub.s32 %s11, 1
        %s620 = sand.u32 %s38, 1
        %s621 = sand.u32 %s38, 1
        %s622 = smul.addr %s621, 32
        %s623 = scalar_lea.vmem [#allocation2], %s622
        // Predicated region
        $region91: #{f1_loss.1} parent=89 // pred_check
          %p624 = pneg %p51
        $region92: #{f1_loss.1} parent=89 // pred_check_branch
          %626 = sbr.rel (%p624) target = $region94
        $region93: #{f1_loss.1} parent=89 // pred_region
          _
        $region94: #{f1_loss.1} parent=89 // pred_fallthru
          _
        %s627 = sand.u32 %s38, 1
        %s628 = sand.u32 %s38, 1
        %s629 = smul.addr %s628, 32
        %s630 = scalar_lea.vmem [#allocation2], %s629
        %p631 = pneg %p51
        %p632 = pneg %p48
        %s633 = sadd.s32 %s20, %s21
        %s634 = smul.u32 2, %s633
        %s635 = ssub.s32 1, %s634
        %s636 = smul.u32 16, %s635
        %p637 = scmp.lt.s32.totalorder %s634, 0
        %s638 = scalar_select %p637, %s634, 0
        %s639 = scalar_lea.vmem %s1, %s638
        %p640 = pneg %p79
        %p641 = pneg %p76
        %p642 = pneg %p105
        %p643 = pneg %p102
        %p644 = scmp.lt.s32.totalorder %s20, 1
        %s645 = scalar_select %p644, %s20, 1
        %s646 = smul.addr %s645, 4
        %s647 = smul.addr %s646, 8
        %s648 = scalar_lea.vmem %s2, %s647
        %p649 = pneg %p131
        %p650 = pneg %p128
        %p651 = scmp.lt.s32.totalorder %s20, 1
        %s652 = scalar_select %p651, %s20, 1
        %s653 = smul.addr %s652, 4
        %s654 = smul.addr %s653, 8
        %s655 = scalar_lea.vmem %s3, %s654
        %p656 = pneg %p157
        %p657 = pneg %p154
        %p658 = scmp.lt.s32.totalorder %s20, 1
        %s659 = scalar_select %p658, %s20, 1
        %s660 = smul.addr %s659, 4
        %s661 = smul.addr %s660, 8
        %s662 = scalar_lea.vmem %s4, %s661
        %s663 = sadd.s32 %s20, %s21
        %s664 = smul.u32 2, %s663
        %s665 = ssub.s32 1, %s664
        %s666 = smul.u32 256, %s665
        %s667 = sadd.s32 %s20, %s21
        %s668 = smul.u32 2, %s667
        %s669 = ssub.s32 1, %s668
        %s670 = smul.u32 16, %s669
        %p671 = scmp.lt.s32.totalorder %s668, 0
        %s672 = scalar_select %p671, %s668, 0
        %s673 = scalar_lea.vmem %s1, %s672
        %s674 = sadd.s32 %s20, %s21
        %s675 = smul.u32 2, %s674
        %s676 = ssub.s32 1, %s675
        %s677 = smul.u32 16, %s676
        %p678 = scmp.lt.s32.totalorder %s20, 1
        %s679 = scalar_select %p678, %s20, 1
        %s680 = smul.addr %s679, 4
        %s681 = smul.addr %s680, 8
        %s682 = scalar_lea.vmem %s2, %s681
        %p683 = scmp.lt.s32.totalorder %s20, 1
        %s684 = scalar_select %p683, %s20, 1
        %s685 = smul.addr %s684, 4
        %s686 = smul.addr %s685, 8
        %s687 = scalar_lea.vmem %s3, %s686
        %p688 = scmp.lt.s32.totalorder %s20, 1
        %s689 = scalar_select %p688, %s20, 1
        %s690 = smul.addr %s689, 4
        %s691 = smul.addr %s690, 8
        %s692 = scalar_lea.vmem %s4, %s691
        %p693 = scmp.eq.s32.totalorder %s21, 0
        // Predicated region
        $region95: #{f1_loss.1} parent=89 // pred_check
          %p694 = pneg %p693
        $region96: #{f1_loss.1} parent=89 // pred_check_branch
          %696 = sbr.rel (%p694) target = $region98
        $region97: #{f1_loss.1} parent=89 // pred_region
          %697 = vst [vmem:[%s682] sm:$0xff] 0.0
          %698 = vst [vmem:[%s682 + $0x8] sm:$0xff] 0.0
          %699 = vst [vmem:[%s682 + $0x10] sm:$0x1] 0.0
          %700 = vst [vmem:[%s682 + $0x18] sm:$0x1] 0.0
          %701 = vst [vmem:[%s687] sm:$0xff] 0.0
          %702 = vst [vmem:[%s687 + $0x8] sm:$0xff] 0.0
          %703 = vst [vmem:[%s687 + $0x10] sm:$0x1] 0.0
          %704 = vst [vmem:[%s687 + $0x18] sm:$0x1] 0.0
          %705 = vst [vmem:[%s692] sm:$0xff] 0.0
          %706 = vst [vmem:[%s692 + $0x8] sm:$0xff] 0.0
          %707 = vst [vmem:[%s692 + $0x10] sm:$0x1] 0.0
          %708 = vst [vmem:[%s692 + $0x18] sm:$0x1] 0.0
        $region98: #{f1_loss.1} parent=89 // pred_fallthru
          _
        %s709 = sadd.s32 %s20, %s21
        %s710 = smul.u32 %s709, 256
        %v711 = vlaneseq
        %v712 = vand.u32 %v711, 127
        %v713 = vadd.s32 %v712, 128
        %v714 = vlaneseq
        %v715 = vshrl.u32 %v714, 7
        %v716 = vadd.s32 %v715, 8
        %v717 = vld [vmem:[%s623] sm:$0xff]
        %v718 = vld [vmem:[%s623 + $0x8] sm:$0xff]
        %v719 = vld [vmem:[%s623 + $0x10] sm:$0x1]
        %v720 = vld [vmem:[%s623 + $0x18] sm:$0x1]
        %v721 = vld [vmem:[%s673] sm:$0x3]
        %s722 = sadd.s32 %s710, 0
        %v723 = vstv %s722
        %v724 = vadd.s32 %v723, %v712
        %v725 = vadd.s32 %v723, %v713
        %vm726 = vcmp.lt.s32.totalorder %v724, 16
        %vm727 = vcmp.lt.s32.totalorder %v725, 16
        %vm728 = vcmask 1040384
        %v729 = vsel %vm728, %v719, -inf
        %v730 = vmax.f32 %v717, %v729
        %v731 = vrot.slane %v730, 4
        %v732 = vmax.f32 %v730, %v731
        %v733 = vrot.slane %v732, 2
        %v734 = vmax.f32 %v732, %v733
        %v735 = vrot.slane %v734, 1
        %v736 = vmax.f32 %v734, %v735
        %v737 = vsel %vm728, %v720, -inf
        %v738 = vmax.f32 %v718, %v737
        %v739 = vrot.slane %v738, 4
        %v740 = vmax.f32 %v738, %v739
        %v741 = vrot.slane %v740, 2
        %v742 = vmax.f32 %v740, %v741
        %v743 = vrot.slane %v742, 1
        %v744 = vmax.f32 %v742, %v743
        %v745 = vsub.f32 %v717, %v736
        %v746 = vsub.f32 %v718, %v744
        %v747 = vsub.f32 %v719, %v736
        %v748 = vsub.f32 %v720, %v744
        %v749 = vmul.f32 %v745, 1.442695
        %v750 = vpow.pop %v749
        %v751 = vmul.f32 %v746, 1.442695
        %v752 = vpow.pop %v751
        %v753 = vmul.f32 %v747, 1.442695
        %v754 = vpow.pop %v753
        %v755 = vmul.f32 %v748, 1.442695
        %v756 = vpow.pop %v755
        %v757 = vsel %vm728, %v754, 0.0
        %v758 = vadd.f32 %v750, %v757
        %v759 = vrot.slane %v758, 4
        %v760 = vadd.f32 %v758, %v759
        %v761 = vrot.slane %v760, 2
        %v762 = vadd.f32 %v760, %v761
        %v763 = vrot.slane %v762, 1
        %v764 = vadd.f32 %v762, %v763
        %v765 = vsel %vm728, %v756, 0.0
        %v766 = vadd.f32 %v752, %v765
        %v767 = vrot.slane %v766, 4
        %v768 = vadd.f32 %v766, %v767
        %v769 = vrot.slane %v768, 2
        %v770 = vadd.f32 %v768, %v769
        %v771 = vrot.slane %v770, 1
        %v772 = vadd.f32 %v770, %v771
        %v773 = vrcp.pop %v764
        %v774 = vrcp.pop %v772
        %v775 = vmul.f32 %v750, %v773
        %v776 = vmul.f32 %v752, %v774
        %v777 = vmul.f32 %v754, %v773
        %v778 = vmul.f32 %v756, %v774
        %v779 = vsel %vm726, 1, 0
        %v780 = vsel %vm727, 1, 0
        %vm781 = vcmp.eq.s32.totalorder %v779, 1
        %vm782 = vcmp.eq.s32.totalorder %v780, 1
        %v783 = vsel %vm781, %v775, 0.0
        %v784 = vsel %vm782, %v776, 0.0
        %v785 = vsel %vm781, %v777, 0.0
        %v786 = vsel %vm782, %v778, 0.0
        %v787 = vlaneseq
        %v788 = vshrl.u32 %v787, 7
        %v789 = vsub.s32 0, %v788
        %v790 = vrot.slane %v721, %v789
        %v791 = vlaneseq
        %v792 = vshrl.u32 %v791, 7
        %v793 = vsub.s32 1, %v792
        %v794 = vrot.slane %v721, %v793
        %vm795 = vcmp.eq.s32.totalorder %v715, %v790
        %vm796 = vcmp.eq.s32.totalorder %v715, %v794
        %vm797 = vcmp.eq.s32.totalorder %v716, %v790
        %vm798 = vcmp.eq.s32.totalorder %v716, %v794
        %vm799 = vmand %vm795, %vm781
        %vm800 = vmand %vm796, %vm782
        %vm801 = vmand %vm797, %vm781
        %vm802 = vmand %vm798, %vm782
        %v803 = vld [vmem:[%s682] sm:$0xff]
        %v804 = vld [vmem:[%s682 + $0x8] sm:$0xff]
        %v805 = vld [vmem:[%s682 + $0x10] sm:$0x1]
        %v806 = vld [vmem:[%s682 + $0x18] sm:$0x1]
        %v807 = vsel %vm799, %v783, 0.0
        %v808 = vsel %vm800, %v784, 0.0
        %v809 = vsel %vm801, %v785, 0.0
        %v810 = vsel %vm802, %v786, 0.0
        %v811 = vadd.f32 %v803, %v807
        %v812 = vadd.f32 %v804, %v808
        %v813 = vadd.f32 %v805, %v809
        %v814 = vadd.f32 %v806, %v810
        %815 = vst [vmem:[%s682] sm:$0xff] %v811
        %816 = vst [vmem:[%s682 + $0x8] sm:$0xff] %v812
        %817 = vst [vmem:[%s682 + $0x10] sm:$0x1] %v813
        %818 = vst [vmem:[%s682 + $0x18] sm:$0x1] %v814
        %v819 = vld [vmem:[%s687] sm:$0xff]
        %v820 = vld [vmem:[%s687 + $0x8] sm:$0xff]
        %v821 = vld [vmem:[%s687 + $0x10] sm:$0x1]
        %v822 = vld [vmem:[%s687 + $0x18] sm:$0x1]
        %v823 = vadd.f32 %v819, %v783
        %v824 = vadd.f32 %v820, %v784
        %v825 = vadd.f32 %v821, %v785
        %v826 = vadd.f32 %v822, %v786
        %827 = vst [vmem:[%s687] sm:$0xff] %v823
        %828 = vst [vmem:[%s687 + $0x8] sm:$0xff] %v824
        %829 = vst [vmem:[%s687 + $0x10] sm:$0x1] %v825
        %830 = vst [vmem:[%s687 + $0x18] sm:$0x1] %v826
        %v831 = vld [vmem:[%s692] sm:$0xff]
        %v832 = vld [vmem:[%s692 + $0x8] sm:$0xff]
        %v833 = vld [vmem:[%s692 + $0x10] sm:$0x1]
        %v834 = vld [vmem:[%s692 + $0x18] sm:$0x1]
        %v835 = vsel %vm799, 1, 0
        %v836 = vsel %vm800, 1, 0
        %v837 = vsel %vm801, 1, 0
        %v838 = vsel %vm802, 1, 0
        %v839 = vcvt.s32.f32 %v835
        %v840 = vcvt.s32.f32 %v836
        %v841 = vcvt.s32.f32 %v837
        %v842 = vcvt.s32.f32 %v838
        %v843 = vadd.f32 %v831, %v839
        %v844 = vadd.f32 %v832, %v840
        %v845 = vadd.f32 %v833, %v841
        %v846 = vadd.f32 %v834, %v842
        %847 = vst [vmem:[%s692] sm:$0xff] %v843
        %848 = vst [vmem:[%s692 + $0x8] sm:$0xff] %v844
        %849 = vst [vmem:[%s692 + $0x10] sm:$0x1] %v845
        %850 = vst [vmem:[%s692 + $0x18] sm:$0x1] %v846
        %p851 = scmp.lt.s32.totalorder %s20, 1
        %s852 = scalar_select %p851, %s20, 1
        %s853 = smul.addr %s852, 4
        %s854 = smul.addr %s853, 8
        %s855 = scalar_lea.vmem %s2, %s854
        %p856 = scmp.lt.s32.totalorder %s20, 1
        %s857 = scalar_select %p856, %s20, 1
        %s858 = smul.addr %s857, 4
        %s859 = smul.addr %s858, 8
        %s860 = scalar_lea.vmem %s3, %s859
        %p861 = scmp.lt.s32.totalorder %s20, 1
        %s862 = scalar_select %p861, %s20, 1
        %s863 = smul.addr %s862, 4
        %s864 = smul.addr %s863, 8
        %s865 = scalar_lea.vmem %s4, %s864
        // Predicated region
        $region99: #{f1_loss.1} parent=89 // pred_check
          %p866 = pneg %p102
        $region100: #{f1_loss.1} parent=89 // pred_check_branch
          %868 = sbr.rel (%p866) target = $region102
        $region101: #{f1_loss.1} parent=89 // pred_region
          _
        $region102: #{f1_loss.1} parent=89 // pred_fallthru
          _
        // Predicated region
        $region103: #{f1_loss.1} parent=89 // pred_check
          %p869 = pneg %p128
        $region104: #{f1_loss.1} parent=89 // pred_check_branch
          %871 = sbr.rel (%p869) target = $region106
        $region105: #{f1_loss.1} parent=89 // pred_region
          _
        $region106: #{f1_loss.1} parent=89 // pred_fallthru
          _
        // Predicated region
        $region107: #{f1_loss.1} parent=89 // pred_check
          %p872 = pneg %p154
        $region108: #{f1_loss.1} parent=89 // pred_check_branch
          %874 = sbr.rel (%p872) target = $region110
        $region109: #{f1_loss.1} parent=89 // pred_region
          _
        $region110: #{f1_loss.1} parent=89 // pred_fallthru
          _
      $region90: #{f1_loss.1} parent=5 // pred_fallthru
        _
      %p875 = scmp.le.s32.totalorder 2, %s11
      // Predicated region
      $region111: #{f1_loss.1} parent=5 // pred_check
        %p876 = pneg %p875
      $region112: #{f1_loss.1} parent=5 // pred_check_branch
        %878 = sbr.rel (%p876) target = $region114
      $region113: #{f1_loss.1} parent=5 // pred_region
        %s879 = ssub.s32 %s11, 2
        // Predicated region
        $region115: #{f1_loss.1} parent=113 // pred_check
          %p880 = pneg %p108
        $region116: #{f1_loss.1} parent=113 // pred_check_branch
          %882 = sbr.rel (%p880) target = $region118
        $region117: #{f1_loss.1} parent=113 // pred_region
          %p883 = scmp.lt.s32.totalorder %s22, 1
          %s884 = scalar_select %p883, %s22, 1
          %s885 = smul.addr %s884, 4
          %s886 = smul.addr %s885, 8
          %s887 = scalar_lea.vmem %s2, %s886
        $region118: #{f1_loss.1} parent=113 // pred_fallthru
          _
        // Predicated region
        $region119: #{f1_loss.1} parent=113 // pred_check
          %p888 = pneg %p134
        $region120: #{f1_loss.1} parent=113 // pred_check_branch
          %890 = sbr.rel (%p888) target = $region122
        $region121: #{f1_loss.1} parent=113 // pred_region
          %p891 = scmp.lt.s32.totalorder %s22, 1
          %s892 = scalar_select %p891, %s22, 1
          %s893 = smul.addr %s892, 4
          %s894 = smul.addr %s893, 8
          %s895 = scalar_lea.vmem %s3, %s894
        $region122: #{f1_loss.1} parent=113 // pred_fallthru
          _
        // Predicated region
        $region123: #{f1_loss.1} parent=113 // pred_check
          %p896 = pneg %p160
        $region124: #{f1_loss.1} parent=113 // pred_check_branch
          %898 = sbr.rel (%p896) target = $region126
        $region125: #{f1_loss.1} parent=113 // pred_region
          %p899 = scmp.lt.s32.totalorder %s22, 1
          %s900 = scalar_select %p899, %s22, 1
          %s901 = smul.addr %s900, 4
          %s902 = smul.addr %s901, 8
          %s903 = scalar_lea.vmem %s4, %s902
        $region126: #{f1_loss.1} parent=113 // pred_fallthru
          _
      $region114: #{f1_loss.1} parent=5 // pred_fallthru
        _
    $region6: #{f1_loss.1} parent=1 // loop_footer
      %s15 = sadd.s32 1, %s11
    $region7: #{f1_loss.1} parent=1 // loop_footer_branch
      %10 = sbr.rel target = $region3
    $region8: #{f1_loss.1} parent=1 // loop_exit
      _

</llo_original>
